<compile_context>
chip_gen: v6e
topology: v6e:2x2x1
jax: 0.10.0
libtpu: 0.0.40
codegen_flags: <defaults>
</compile_context>

<pallas_src>
import functools

import jax
import jax.numpy as jnp
from jax.experimental import pallas as pl
from jax.experimental.pallas import tpu as pltpu


def _round_up(x, m):
    return ((x + m - 1) // m) * m


def masked_ce_kernel(lengths_ref, logits_ref, target_ref, loss_acc_ref, mask_acc_ref):
    """One (batch b, time-tile tj) step.

    lengths_ref : SMEM (B,) int32           (scalar prefetch)
    logits_ref  : VMEM (1, C, T_TILE)       (native B,C,T layout; T on lanes)
    target_ref  : VMEM (1, 1, T_TILE) int32
    loss_acc_ref: VMEM (1, 1, T_TILE) f32   per-batch lane accumulator (masked losses)
    mask_acc_ref: VMEM (1, 1, T_TILE) f32   per-batch lane accumulator (mask counts)
    """
    b = pl.program_id(0)
    tj = pl.program_id(1)
    _, C, T_TILE = logits_ref.shape

    # Zero the per-batch accumulators on the first time tile.
    @pl.when(tj == 0)
    def _():
        loss_acc_ref[...] = jnp.zeros_like(loss_acc_ref)
        mask_acc_ref[...] = jnp.zeros_like(mask_acc_ref)

    length = lengths_ref[b]
    t_start = tj * T_TILE

    # Skip all vector compute for fully-masked time tiles.
    @pl.when(t_start < length)
    def _():
        x = logits_ref[0].astype(jnp.float32)                     # (C, T_TILE)

        # Numerically stable per-position cross entropy over the class (sublane) axis.
        m = jnp.max(x, axis=0, keepdims=True)                     # (1, T_TILE)
        shifted = x - m                                           # (C, T_TILE)
        sumexp = jnp.sum(jnp.exp(shifted), axis=0, keepdims=True)  # (1, T_TILE)
        lse_minus_m = jnp.log(sumexp)                             # (1, T_TILE)

        # Gather target-class (shifted) logit via compare + masked sublane sum.
        tgt = target_ref[0]                                       # (1, T_TILE) int32
        class_ids = jax.lax.broadcasted_iota(jnp.int32, (C, T_TILE), 0)
        tgt_shifted = jnp.sum(
            jnp.where(class_ids == tgt, shifted, 0.0), axis=0, keepdims=True
        )                                                         # (1, T_TILE)

        # lse - logits[target] == (m + lse_minus_m) - (tgt_shifted + m)
        losses = lse_minus_m - tgt_shifted                        # (1, T_TILE)

        # sequence mask for this tile: global t index < length
        t_ids = t_start + jax.lax.broadcasted_iota(jnp.int32, (1, T_TILE), 1)
        maskf = (t_ids < length).astype(jnp.float32)              # (1, T_TILE)

        loss_acc_ref[...] += (losses * maskf)[None]
        mask_acc_ref[...] += maskf[None]


@functools.partial(jax.jit, static_argnames=("max_len", "t_tile"))
def masked_cross_entropy_loss(input_nct1, target_bt1, lengths, max_len=None, t_tile=512):
    """input_nct1: (B, C, T, 1) float logits; target_bt1: (B, T, 1) int; lengths: (B,)."""
    B, C, T, _ = input_nct1.shape
    if max_len is None:
        max_len = T
    assert max_len == T, "mask is padded to the target time axis"

    # Native layout: no transpose — just squeeze the trailing singleton dim.
    logits = input_nct1[..., 0]                                   # (B, C, T)
    target = target_bt1[..., 0].astype(jnp.int32)                 # (B, T)
    lengths = jnp.minimum(lengths.astype(jnp.int32), T)           # (B,)

    # Lane-friendly time tiling (pad T up to a multiple of the tile).
    t_tile = min(t_tile, _round_up(T, 128))
    T_pad = _round_up(T, t_tile)
    if T_pad != T:
        logits = jnp.pad(logits, ((0, 0), (0, 0), (0, T_pad - T)))
        target = jnp.pad(target, ((0, 0), (0, T_pad - T)))
    target = target[:, None, :]                                   # (B, 1, T_pad)
    n_t = T_pad // t_tile

    grid_spec = pltpu.PrefetchScalarGridSpec(
        num_scalar_prefetch=1,
        grid=(B, n_t),
        in_specs=[
            pl.BlockSpec((1, C, t_tile), lambda b, tj, lens: (b, 0, tj)),
            pl.BlockSpec((1, 1, t_tile), lambda b, tj, lens: (b, 0, tj)),
        ],
        out_specs=[
            pl.BlockSpec((1, 1, t_tile), lambda b, tj, lens: (b, 0, 0)),
            pl.BlockSpec((1, 1, t_tile), lambda b, tj, lens: (b, 0, 0)),
        ],
    )

    loss_acc, mask_acc = pl.pallas_call(
        masked_ce_kernel,
        out_shape=(
            jax.ShapeDtypeStruct((B, 1, t_tile), jnp.float32),
            jax.ShapeDtypeStruct((B, 1, t_tile), jnp.float32),
        ),
        grid_spec=grid_spec,
        compiler_params=pltpu.CompilerParams(
            dimension_semantics=("parallel", "arbitrary"),
        ),
    )(lengths, logits, target)

    # Final division only after both full sums are accumulated.
    return jnp.sum(loss_acc) / jnp.sum(mask_acc)


if __name__ == "__main__":
    B, C, T = 2, 32, 8   # batch=2, num_classes=32, seq=8
    key = jax.random.PRNGKey(0)
    k1, k2 = jax.random.split(key)

    x = jax.random.normal(k1, (B, C, T, 1), dtype=jnp.float32)          # logits
    target = jax.random.randint(k2, (B, T, 1), 0, C, dtype=jnp.int32)   # class ids
    lengths = jnp.array([T, 5], dtype=jnp.int32)                        # valid lengths

    loss = masked_cross_entropy_loss(x, target, lengths)
    loss = jax.block_until_ready(loss)

    # plain-JAX reference for verification
    logits_ref = jnp.transpose(x[..., 0], (0, 2, 1))                    # (B, T, C)
    logp = jax.nn.log_softmax(logits_ref, axis=-1)
    nll = -jnp.take_along_axis(logp, target[..., 0][..., None], axis=-1)[..., 0]
    mask = (jnp.arange(T)[None, :] < lengths[:, None]).astype(jnp.float32)
    ref = jnp.sum(nll * mask) / jnp.sum(mask)

    assert jnp.allclose(loss, ref, rtol=1e-5, atol=1e-5), (loss, ref)
    print("KERNEL_OK")
</pallas_src>

<mosaic_0001>
module attributes {stable_mosaic.version = 11 : i64} {
  func.func @masked_ce_kernel(%arg0: i32, %arg1: i32, %arg2: memref<2xi32, #tpu.memory_space<smem>>, %arg3: memref<1x32x128xf32, #tpu.memory_space<vmem>>, %arg4: memref<1x1x128xi32, #tpu.memory_space<vmem>>, %arg5: memref<1x1x128xf32, #tpu.memory_space<vmem>>, %arg6: memref<1x1x128xf32, #tpu.memory_space<vmem>>) attributes {dimension_semantics = [#tpu.dimension_semantics<parallel>, #tpu.dimension_semantics<arbitrary>], iteration_bounds = array<i64: 2, 1>, scalar_prefetch = 1 : i64, scratch_operands = 0 : i64, tpu.core_type = #tpu.core_type<tc>, window_params = [{transform_indices = @transform_0, window_bounds = array<i64: 1, 32, 128>}, {transform_indices = @transform_1, window_bounds = array<i64: 1, 1, 128>}, {transform_indices = @transform_2, window_bounds = array<i64: 1, 1, 128>}, {transform_indices = @transform_3, window_bounds = array<i64: 1, 1, 128>}]} {
    %c0_i32 = arith.constant 0 : i32
    %0 = arith.cmpi eq, %arg1, %c0_i32 : i32
    %1 = arith.extui %0 : i1 to i32
    %c0_i32_0 = arith.constant 0 : i32
    %2 = arith.cmpi ne, %1, %c0_i32_0 : i32
    scf.if %2 {
      %cst = arith.constant 0.000000e+00 : f32
      %9 = vector.broadcast %cst : f32 to vector<1x1x128xf32>
      %c0 = arith.constant 0 : index
      %c0_2 = arith.constant 0 : index
      %c0_3 = arith.constant 0 : index
      %10 = vector.load %arg5[%c0, %c0_2, %c0_3] : memref<1x1x128xf32, #tpu.memory_space<vmem>>, vector<1x1x128xf32>
      tpu.vector_store %arg5[%c0, %c0_2, %c0_3], %9 {strides = array<i32>} : memref<1x1x128xf32, #tpu.memory_space<vmem>>, vector<1x1x128xf32>,
      %cst_4 = arith.constant 0.000000e+00 : f32
      %11 = vector.broadcast %cst_4 : f32 to vector<1x1x128xf32>
      %c0_5 = arith.constant 0 : index
      %c0_6 = arith.constant 0 : index
      %c0_7 = arith.constant 0 : index
      %12 = vector.load %arg6[%c0_5, %c0_6, %c0_7] : memref<1x1x128xf32, #tpu.memory_space<vmem>>, vector<1x1x128xf32>
      tpu.vector_store %arg6[%c0_5, %c0_6, %c0_7], %11 {strides = array<i32>} : memref<1x1x128xf32, #tpu.memory_space<vmem>>, vector<1x1x128xf32>,
    } else {
    }
    %3 = arith.index_cast %arg0 : i32 to index
    %4 = memref.load %arg2[%3] : memref<2xi32, #tpu.memory_space<smem>>
    %c128_i32 = arith.constant 128 : i32
    %5 = arith.muli %arg1, %c128_i32 : i32
    %6 = arith.cmpi slt, %5, %4 : i32
    %7 = arith.extui %6 : i1 to i32
    %c0_i32_1 = arith.constant 0 : i32
    %8 = arith.cmpi ne, %7, %c0_i32_1 : i32
    scf.if %8 {
      %c0 = arith.constant 0 : index
      %c0_2 = arith.constant 0 : index
      %c0_3 = arith.constant 0 : index
      %9 = vector.load %arg3[%c0, %c0_2, %c0_3] : memref<1x32x128xf32, #tpu.memory_space<vmem>>, vector<1x32x128xf32>
      %10 = vector.shape_cast %9 : vector<1x32x128xf32> to vector<32x128xf32>
      %cst = arith.constant dense<0xFF800000> : vector<128xf32>
      %11 = vector.multi_reduction <maximumf>, %10, %cst [0] : vector<32x128xf32> to vector<128xf32>
      %12 = vector.shape_cast %11 : vector<128xf32> to vector<1x128xf32>
      %13 = vector.broadcast %12 : vector<1x128xf32> to vector<32x128xf32>
      %14 = arith.subf %10, %13 : vector<32x128xf32>
      %15 = math.exp %14 : vector<32x128xf32>
      %cst_4 = arith.constant dense<0.000000e+00> : vector<128xf32>
      %16 = vector.multi_reduction <add>, %15, %cst_4 [0] : vector<32x128xf32> to vector<128xf32>
      %17 = vector.shape_cast %16 : vector<128xf32> to vector<1x128xf32>
      %18 = math.log %17 : vector<1x128xf32>
      %c0_5 = arith.constant 0 : index
      %c0_6 = arith.constant 0 : index
      %c0_7 = arith.constant 0 : index
      %19 = vector.load %arg4[%c0_5, %c0_6, %c0_7] : memref<1x1x128xi32, #tpu.memory_space<vmem>>, vector<1x1x128xi32>
      %20 = vector.shape_cast %19 : vector<1x1x128xi32> to vector<1x128xi32>
      %21 = tpu.iota {dimensions = array<i32: 0>} : vector<32x128xi32>
      %22 = vector.broadcast %20 : vector<1x128xi32> to vector<32x128xi32>
      %23 = arith.cmpi eq, %21, %22 : vector<32x128xi32>
      %cst_8 = arith.constant 0.000000e+00 : f32
      %24 = vector.broadcast %cst_8 : f32 to vector<32x128xf32>
      %25 = arith.select %23, %14, %24 : vector<32x128xi1>, vector<32x128xf32>
      %cst_9 = arith.constant dense<0.000000e+00> : vector<128xf32>
      %26 = vector.multi_reduction <add>, %25, %cst_9 [0] : vector<32x128xf32> to vector<128xf32>
      %27 = vector.shape_cast %26 : vector<128xf32> to vector<1x128xf32>
      %28 = arith.subf %18, %27 : vector<1x128xf32>
      %29 = tpu.iota {dimensions = array<i32: 1>} : vector<1x128xi32>
      %30 = vector.broadcast %5 : i32 to vector<1x128xi32>
      %31 = arith.addi %30, %29 : vector<1x128xi32>
      %32 = vector.broadcast %4 : i32 to vector<1x128xi32>
      %33 = arith.cmpi slt, %31, %32 : vector<1x128xi32>
      %34 = arith.extui %33 : vector<1x128xi1> to vector<1x128xi32>
      %35 = arith.sitofp %34 : vector<1x128xi32> to vector<1x128xf32>
      %c0_10 = arith.constant 0 : index
      %c0_11 = arith.constant 0 : index
      %c0_12 = arith.constant 0 : index
      %36 = vector.load %arg5[%c0_10, %c0_11, %c0_12] : memref<1x1x128xf32, #tpu.memory_space<vmem>>, vector<1x1x128xf32>
      %37 = arith.mulf %28, %35 : vector<1x128xf32>
      %38 = vector.shape_cast %37 : vector<1x128xf32> to vector<1x1x128xf32>
      %39 = arith.addf %36, %38 : vector<1x1x128xf32>
      %c0_13 = arith.constant 0 : index
      %c0_14 = arith.constant 0 : index
      %c0_15 = arith.constant 0 : index
      %40 = vector.load %arg5[%c0_13, %c0_14, %c0_15] : memref<1x1x128xf32, #tpu.memory_space<vmem>>, vector<1x1x128xf32>
      tpu.vector_store %arg5[%c0_13, %c0_14, %c0_15], %39 {strides = array<i32>} : memref<1x1x128xf32, #tpu.memory_space<vmem>>, vector<1x1x128xf32>,
      %c0_16 = arith.constant 0 : index
      %c0_17 = arith.constant 0 : index
      %c0_18 = arith.constant 0 : index
      %41 = vector.load %arg6[%c0_16, %c0_17, %c0_18] : memref<1x1x128xf32, #tpu.memory_space<vmem>>, vector<1x1x128xf32>
      %42 = vector.shape_cast %35 : vector<1x128xf32> to vector<1x1x128xf32>
      %43 = arith.addf %41, %42 : vector<1x1x128xf32>
      %c0_19 = arith.constant 0 : index
      %c0_20 = arith.constant 0 : index
      %c0_21 = arith.constant 0 : index
      %44 = vector.load %arg6[%c0_19, %c0_20, %c0_21] : memref<1x1x128xf32, #tpu.memory_space<vmem>>, vector<1x1x128xf32>
      tpu.vector_store %arg6[%c0_19, %c0_20, %c0_21], %43 {strides = array<i32>} : memref<1x1x128xf32, #tpu.memory_space<vmem>>, vector<1x1x128xf32>,
    } else {
    }
    return
  }
  func.func @transform_0(%arg0: i32, %arg1: i32, %arg2: memref<2xi32, #tpu.memory_space<smem>>) -> (i32, i32, i32) {
    %c0_i32 = arith.constant 0 : i32
    %c0_i32_0 = arith.constant 0 : i32
    return %arg0, %c0_i32, %arg1 : i32, i32, i32
  }
  func.func @transform_1(%arg0: i32, %arg1: i32, %arg2: memref<2xi32, #tpu.memory_space<smem>>) -> (i32, i32, i32) {
    %c0_i32 = arith.constant 0 : i32
    %c0_i32_0 = arith.constant 0 : i32
    return %arg0, %c0_i32, %arg1 : i32, i32, i32
  }
  func.func @transform_2(%arg0: i32, %arg1: i32, %arg2: memref<2xi32, #tpu.memory_space<smem>>) -> (i32, i32, i32) {
    %c0_i32 = arith.constant 0 : i32
    %c0_i32_0 = arith.constant 0 : i32
    %c0_i32_1 = arith.constant 0 : i32
    return %arg0, %c0_i32, %c0_i32_0 : i32, i32, i32
  }
  func.func @transform_3(%arg0: i32, %arg1: i32, %arg2: memref<2xi32, #tpu.memory_space<smem>>) -> (i32, i32, i32) {
    %c0_i32 = arith.constant 0 : i32
    %c0_i32_0 = arith.constant 0 : i32
    %c0_i32_1 = arith.constant 0 : i32
    return %arg0, %c0_i32, %c0_i32_0 : i32, i32, i32
  }
}

</mosaic_0001>

<llo_original>
// kernel: masked_cross_entropy_loss.1
$region0: #{masked_cross_entropy_loss.1}
  #allocation0 [shape = 'u32[]', space=smem, size = 0x4, offset = 0x4, fixed_abs, tag = 'smem constant byte address 0x4 - core index']
  #allocation1 [shape = 'u32[144,128]{1,0:T(1,128)}', space=vmem, size = 0x12000, scoped, tag = 'internal scratch']
  #allocation2 [shape = 's32[1]{0}', space=sflag, size = 0x4, scoped, tag = 'scoped memory for masked_cross_entropy_loss.1']
  #allocation3 [shape = 'u8[512]{0}', space=smem, size = 0x200, scoped, tag = 'prefetched SMEM operand 0']
  %s0 = inlined_call_operand.vmem [shape: s32[2], index: 0, kind: input, shape index: {}]
  %s1 = inlined_call_operand.vmem [shape: f32[2,32,128], index: 1, kind: input, shape index: {}]
  %s2 = inlined_call_operand.vmem [shape: s32[2,1,128], index: 2, kind: input, shape index: {}]
  %s3 = inlined_call_operand.vmem [shape: f32[2,1,128], index: 3, kind: output, shape index: {0}]
  %s4 = inlined_call_operand.vmem [shape: f32[2,1,128], index: 4, kind: output, shape index: {1}]
  %5 = xla_tuple %s3, %s4
  %s6 = sld [smem:[#allocation0]]
  $region57: #{masked_cross_entropy_loss.1} parent=0
    _
  %s8 = ssub.s32 1, %s6
  %s9 = scalar_select 0, %s8, %s6
  %s10 = sshll.u32 %s0, 4
  %s11 = int_to_ptr.vmem [resolvable:$true] %s10
  %13 = dma.vmem_to_smem %s11, 16, [#allocation3], [#allocation2]
  %14 = dma.done [#allocation2], 16
  %15 = sfence
  loop: start=0, step=1, limit=4
  $region2: #{masked_cross_entropy_loss.1} parent=0 // loop_pre_header
    _
  $region3: #{masked_cross_entropy_loss.1} parent=0 // loop_header
    %s17 = sphi 0, %s21
    %p18 = scmp.ge.s32.totalorder %s17, 4
    %s24 = sphi 0, %s36
    %s25 = sphi 0, %s32
    %s26 = sphi 0, %s24
    %s27 = sphi 0, %s25
    %s28 = sphi 0, %s26
    %s29 = sphi 0, %s27
    %s41 = sphi 0, %s43
    %s44 = sphi 0, %s41
    %s45 = sphi 0, %s44
    %s61 = sphi 0, %s45
    %s69 = sphi 0, %s71
    %s72 = sphi 0, %s69
    %s73 = sphi 0, %s72
    %s89 = sphi 0, %s73
    %s95 = sphi 0, %s97
    %s98 = sphi 0, %s95
    %s99 = sphi 0, %s98
    %s115 = sphi 0, %s99
    %s121 = sphi 0, %s123
    %s124 = sphi 0, %s121
    %s125 = sphi 0, %s124
    %s141 = sphi 0, %s125
  $region4: #{masked_cross_entropy_loss.1} parent=0 // loop_header_branch
    %20 = sbr.rel (%p18) target = $region8
  $region5: #{masked_cross_entropy_loss.1} parent=0 // loop_body
    %s22 = ssub.s32 %s17, 1
    %s23 = ssub.s32 %s17, 2
    %s30 = sadd.s32 1, %s25
    %p31 = scmp.ge.s32.totalorder %s30, 1
    %s32 = scalar_select %p31, 0, %s30
    %s33 = sadd.s32 1, %s24
    %s34 = scalar_select %p31, %s33, %s24
    %p35 = scmp.ge.s32.totalorder %s34, 2
    %s36 = scalar_select %p35, 0, %s34
    %s37 = ssub.s32 %s24, %s36
    %s38 = ssub.s32 %s25, %s32
    %s39 = sor.u32 %s37, %s38
    %p40 = scmp.eq.s32.totalorder %s39, 0
    %s42 = sadd.s32 %s41, 1
    %s43 = scalar_select %p40, %s41, %s42
    %p46 = pneg %p40
    %p47 = scmp.eq.s32.totalorder %s17, 1
    %p48 = por %p46, %p47
    %p49 = scmp.ne.s32.totalorder %s41, %s44
    %p50 = scmp.eq.s32.totalorder %s17, 0
    %p51 = por %p49, %p50
    %p52 = scmp.ne.s32.totalorder %s41, %s44
    %p53 = scmp.eq.s32.totalorder %s22, 1
    %p54 = por %p52, %p53
    %p55 = scmp.ne.s32.totalorder %s44, %s45
    %p56 = scmp.eq.s32.totalorder %s22, 0
    %p57 = por %p55, %p56
    %p58 = scmp.ne.s32.totalorder %s44, %s45
    %p59 = scmp.eq.s32.totalorder %s23, 1
    %p60 = por %p58, %p59
    %p62 = scmp.ne.s32.totalorder %s45, %s61
    %p63 = scmp.eq.s32.totalorder %s23, 0
    %p64 = por %p62, %p63
    %s65 = ssub.s32 %s24, %s36
    %s66 = ssub.s32 %s25, %s32
    %s67 = sor.u32 %s65, %s66
    %p68 = scmp.eq.s32.totalorder %s67, 0
    %s70 = sadd.s32 %s69, 1
    %s71 = scalar_select %p68, %s69, %s70
    %p74 = pneg %p68
    %p75 = scmp.eq.s32.totalorder %s17, 1
    %p76 = por %p74, %p75
    %p77 = scmp.ne.s32.totalorder %s69, %s72
    %p78 = scmp.eq.s32.totalorder %s17, 0
    %p79 = por %p77, %p78
    %p80 = scmp.ne.s32.totalorder %s69, %s72
    %p81 = scmp.eq.s32.totalorder %s22, 1
    %p82 = por %p80, %p81
    %p83 = scmp.ne.s32.totalorder %s72, %s73
    %p84 = scmp.eq.s32.totalorder %s22, 0
    %p85 = por %p83, %p84
    %p86 = scmp.ne.s32.totalorder %s72, %s73
    %p87 = scmp.eq.s32.totalorder %s23, 1
    %p88 = por %p86, %p87
    %p90 = scmp.ne.s32.totalorder %s73, %s89
    %p91 = scmp.eq.s32.totalorder %s23, 0
    %p92 = por %p90, %p91
    %s93 = ssub.s32 %s24, %s36
    %p94 = scmp.eq.s32.totalorder %s93, 0
    %s96 = sadd.s32 %s95, 1
    %s97 = scalar_select %p94, %s95, %s96
    %p100 = pneg %p94
    %p101 = scmp.eq.s32.totalorder %s17, 1
    %p102 = por %p100, %p101
    %p103 = scmp.ne.s32.totalorder %s95, %s98
    %p104 = scmp.eq.s32.totalorder %s17, 0
    %p105 = por %p103, %p104
    %p106 = scmp.ne.s32.totalorder %s95, %s98
    %p107 = scmp.eq.s32.totalorder %s22, 1
    %p108 = por %p106, %p107
    %p109 = scmp.ne.s32.totalorder %s98, %s99
    %p110 = scmp.eq.s32.totalorder %s22, 0
    %p111 = por %p109, %p110
    %p112 = scmp.ne.s32.totalorder %s98, %s99
    %p113 = scmp.eq.s32.totalorder %s23, 1
    %p114 = por %p112, %p113
    %p116 = scmp.ne.s32.totalorder %s99, %s115
    %p117 = scmp.eq.s32.totalorder %s23, 0
    %p118 = por %p116, %p117
    %s119 = ssub.s32 %s24, %s36
    %p120 = scmp.eq.s32.totalorder %s119, 0
    %s122 = sadd.s32 %s121, 1
    %s123 = scalar_select %p120, %s121, %s122
    %p126 = pneg %p120
    %p127 = scmp.eq.s32.totalorder %s17, 1
    %p128 = por %p126, %p127
    %p129 = scmp.ne.s32.totalorder %s121, %s124
    %p130 = scmp.eq.s32.totalorder %s17, 0
    %p131 = por %p129, %p130
    %p132 = scmp.ne.s32.totalorder %s121, %s124
    %p133 = scmp.eq.s32.totalorder %s22, 1
    %p134 = por %p132, %p133
    %p135 = scmp.ne.s32.totalorder %s124, %s125
    %p136 = scmp.eq.s32.totalorder %s22, 0
    %p137 = por %p135, %p136
    %p138 = scmp.ne.s32.totalorder %s124, %s125
    %p139 = scmp.eq.s32.totalorder %s23, 1
    %p140 = por %p138, %p139
    %p142 = scmp.ne.s32.totalorder %s125, %s141
    %p143 = scmp.eq.s32.totalorder %s23, 0
    %p144 = por %p142, %p143
    %p145 = scmp.le.s32.totalorder 1, %s17
    %p146 = scmp.lt.s32.totalorder %s17, 3
    %p147 = pnand %p145, %p146
    %p148 = pneg %p147
    // Predicated region
    $region9: #{masked_cross_entropy_loss.1} parent=5 // pred_check
      _
    $region10: #{masked_cross_entropy_loss.1} parent=5 // pred_check_branch
      %150 = sbr.rel (%p147) target = $region12
    $region11: #{masked_cross_entropy_loss.1} parent=5 // pred_region
      %s151 = ssub.s32 %s17, 1
    $region12: #{masked_cross_entropy_loss.1} parent=5 // pred_fallthru
      _
    %p152 = scmp.lt.s32.totalorder %s17, 2
    // Predicated region
    $region13: #{masked_cross_entropy_loss.1} parent=5 // pred_check
      %p153 = pneg %p152
    $region14: #{masked_cross_entropy_loss.1} parent=5 // pred_check_branch
      %155 = sbr.rel (%p153) target = $region16
    $region15: #{masked_cross_entropy_loss.1} parent=5 // pred_region
      // Predicated region
      $region17: #{masked_cross_entropy_loss.1} parent=15 // pred_check
        %p156 = pneg %p51
      $region18: #{masked_cross_entropy_loss.1} parent=15 // pred_check_branch
        %158 = sbr.rel (%p156) target = $region20
      $region19: #{masked_cross_entropy_loss.1} parent=15 // pred_region
        %p159 = scmp.lt.s32.totalorder %s24, 1
        %s160 = scalar_select %p159, %s24, 1
        %p161 = scmp.lt.s32.totalorder %s25, 0
        %s162 = scalar_select %p161, %s25, 0
        %s163 = smul.addr %s160, 4
        %s164 = sadd.s32 %s162, %s163
        %s165 = smul.addr %s164, 8
        %s166 = scalar_lea.vmem %s1, %s165
      $region20: #{masked_cross_entropy_loss.1} parent=15 // pred_fallthru
        _
      // Predicated region
      $region21: #{masked_cross_entropy_loss.1} parent=15 // pred_check
        %p167 = pneg %p79
      $region22: #{masked_cross_entropy_loss.1} parent=15 // pred_check_branch
        %169 = sbr.rel (%p167) target = $region24
      $region23: #{masked_cross_entropy_loss.1} parent=15 // pred_region
        %p170 = scmp.lt.s32.totalorder %s24, 1
        %s171 = scalar_select %p170, %s24, 1
        %p172 = scmp.lt.s32.totalorder %s25, 0
        %s173 = scalar_select %p172, %s25, 0
        %s174 = sadd.s32 %s173, %s171
        %s175 = scalar_lea.vmem %s2, %s174
      $region24: #{masked_cross_entropy_loss.1} parent=15 // pred_fallthru
        _
    $region16: #{masked_cross_entropy_loss.1} parent=5 // pred_fallthru
      _
    %p176 = scmp.le.s32.totalorder 1, %s17
    %p177 = scmp.lt.s32.totalorder %s17, 3
    %p178 = pnand %p176, %p177
    %p179 = pneg %p178
    // Predicated region
    $region25: #{masked_cross_entropy_loss.1} parent=5 // pred_check
      _
    $region26: #{masked_cross_entropy_loss.1} parent=5 // pred_check_branch
      %181 = sbr.rel (%p178) target = $region28
    $region27: #{masked_cross_entropy_loss.1} parent=5 // pred_region
      %s182 = ssub.s32 %s17, 1
      %p183 = scmp.lt.s32.totalorder %s26, 1
      %s184 = scalar_select %p183, %s26, 1
      %p185 = scmp.lt.s32.totalorder %s27, 0
      %s186 = scalar_select %p185, %s27, 0
      %s187 = smul.addr %s184, 4
      %s188 = sadd.s32 %s186, %s187
      %s189 = smul.addr %s188, 8
      %s190 = scalar_lea.vmem %s1, %s189
      %p191 = pneg %p57
      %p192 = pneg %p54
      %p193 = scmp.lt.s32.totalorder %s26, 1
      %s194 = scalar_select %p193, %s26, 1
      %p195 = scmp.lt.s32.totalorder %s27, 0
      %s196 = scalar_select %p195, %s27, 0
      %s197 = sadd.s32 %s196, %s194
      %s198 = scalar_lea.vmem %s2, %s197
      %p199 = pneg %p85
      %p200 = pneg %p82
      %p201 = pneg %p111
      %p202 = pneg %p108
      %p203 = scmp.lt.s32.totalorder %s26, 1
      %s204 = scalar_select %p203, %s26, 1
      %s205 = scalar_lea.vmem %s3, %s204
      %p206 = pneg %p137
      %p207 = pneg %p134
      %p208 = scmp.lt.s32.totalorder %s26, 1
      %s209 = scalar_select %p208, %s26, 1
      %s210 = scalar_lea.vmem %s4, %s209
      %p211 = scmp.lt.s32.totalorder %s26, 1
      %s212 = scalar_select %p211, %s26, 1
      %p213 = scmp.lt.s32.totalorder %s27, 0
      %s214 = scalar_select %p213, %s27, 0
      %s215 = smul.addr %s212, 4
      %s216 = sadd.s32 %s214, %s215
      %s217 = smul.addr %s216, 8
      %s218 = scalar_lea.vmem %s1, %s217
      %p219 = scmp.lt.s32.totalorder %s26, 1
      %s220 = scalar_select %p219, %s26, 1
      %p221 = scmp.lt.s32.totalorder %s27, 0
      %s222 = scalar_select %p221, %s27, 0
      %s223 = sadd.s32 %s222, %s220
      %s224 = scalar_lea.vmem %s2, %s223
      %p225 = scmp.lt.s32.totalorder %s26, 1
      %s226 = scalar_select %p225, %s26, 1
      %s227 = scalar_lea.vmem %s3, %s226
      %p228 = scmp.lt.s32.totalorder %s26, 1
      %s229 = scalar_select %p228, %s26, 1
      %s230 = scalar_lea.vmem %s4, %s229
      %p231 = scmp.eq.s32.totalorder %s27, 0
      // Predicated region
      $region29: #{masked_cross_entropy_loss.1} parent=27 // pred_check
        %p232 = pneg %p231
      $region30: #{masked_cross_entropy_loss.1} parent=27 // pred_check_branch
        %234 = sbr.rel (%p232) target = $region32
      $region31: #{masked_cross_entropy_loss.1} parent=27 // pred_region
        %235 = vst [vmem:[%s227] sm:$0x1] 0.0
        %236 = vst [vmem:[%s230] sm:$0x1] 0.0
      $region32: #{masked_cross_entropy_loss.1} parent=27 // pred_fallthru
        _
      %s237 = sld [smem:[#allocation3 + %s26]]
      %s238 = smul.u32 %s27, 128
      %p239 = scmp.lt.s32.totalorder %s238, %s237
      // Predicated region
      $region33: #{masked_cross_entropy_loss.1} parent=27 // pred_check
        %p240 = pneg %p239
      $region34: #{masked_cross_entropy_loss.1} parent=27 // pred_check_branch
        %242 = sbr.rel (%p240) target = $region36
      $region35: #{masked_cross_entropy_loss.1} parent=27 // pred_region
        %v243 = vld [vmem:[%s218] sm:$0xff]
        %v244 = vld [vmem:[%s218 + $0x8] sm:$0xff]
        %v245 = vld [vmem:[%s218 + $0x10] sm:$0xff]
        %v246 = vld [vmem:[%s218 + $0x18] sm:$0xff]
        %v247 = vmax.f32 %v243, %v244
        %v248 = vmax.f32 %v245, %v246
        %v249 = vmax.f32 %v247, %v248
        %v250 = vrot.slane %v249, 4
        %v251 = vmax.f32 %v249, %v250
        %v252 = vrot.slane %v251, 2
        %v253 = vmax.f32 %v251, %v252
        %v254 = vrot.slane %v253, 1
        %v255 = vmax.f32 %v253, %v254
        %v256 = vsub.f32 %v243, %v255
        %v257 = vsub.f32 %v244, %v255
        %v258 = vsub.f32 %v245, %v255
        %v259 = vsub.f32 %v246, %v255
        %v260 = vmul.f32 %v256, 1.442695
        %v261 = vpow.pop %v260
        %v262 = vmul.f32 %v257, 1.442695
        %v263 = vpow.pop %v262
        %v264 = vmul.f32 %v258, 1.442695
        %v265 = vpow.pop %v264
        %v266 = vmul.f32 %v259, 1.442695
        %v267 = vpow.pop %v266
        %v268 = vadd.f32 %v261, %v263
        %v269 = vadd.f32 %v268, %v265
        %v270 = vadd.f32 %v269, %v267
        %v271 = vrot.slane %v270, 4
        %v272 = vadd.f32 %v270, %v271
        %v273 = vrot.slane %v272, 2
        %v274 = vadd.f32 %v272, %v273
        %v275 = vrot.slane %v274, 1
        %v276 = vadd.f32 %v274, %v275
        %v277 = vlog2.pop %v276
        %v278 = vmul.f32 %v277, 0.6931472
        %v279 = vld [vmem:[%s224] sm:$0x1]
        %v280 = vlaneseq
        %v281 = vshrl.u32 %v280, 7
        %v282 = vadd.s32 %v281, 8
        %v283 = vadd.s32 %v281, 16
        %v284 = vadd.s32 %v281, 24
        %v285 = vlaneseq
        %v286 = vshrl.u32 %v285, 7
        %v287 = vsub.s32 0, %v286
        %v288 = vrot.slane %v279, %v287
        %vm289 = vcmp.eq.s32.totalorder %v281, %v288
        %vm290 = vcmp.eq.s32.totalorder %v282, %v288
        %vm291 = vcmp.eq.s32.totalorder %v283, %v288
        %vm292 = vcmp.eq.s32.totalorder %v284, %v288
        %v293 = vsel %vm289, %v256, 0.0
        %v294 = vsel %vm290, %v257, 0.0
        %v295 = vsel %vm291, %v258, 0.0
        %v296 = vsel %vm292, %v259, 0.0
        %v297 = vadd.f32 %v293, %v294
        %v298 = vadd.f32 %v297, %v295
        %v299 = vadd.f32 %v298, %v296
        %v300 = vrot.slane %v299, 4
        %v301 = vadd.f32 %v299, %v300
        %v302 = vrot.slane %v301, 2
        %v303 = vadd.f32 %v301, %v302
        %v304 = vrot.slane %v303, 1
        %v305 = vadd.f32 %v303, %v304
        %v306 = vsub.f32 %v278, %v305
        %v307 = vlaneseq
        %v308 = vand.u32 %v307, 127
        %v309 = vstv %s238
        %v310 = vadd.s32 %v309, %v308
        %v311 = vstv %s237
        %vm312 = vcmp.lt.s32.totalorder %v310, %v311
        %v313 = vsel %vm312, 1, 0
        %v314 = vcvt.s32.f32 %v313
        %v315 = vld [vmem:[%s227] sm:$0x1]
        %v316 = vmul.f32 %v306, %v314
        %v317 = vadd.f32 %v315, %v316
        %318 = vst [vmem:[%s227] sm:$0x1] %v317
        %v319 = vld [vmem:[%s230] sm:$0x1]
        %v320 = vadd.f32 %v319, %v314
        %321 = vst [vmem:[%s230] sm:$0x1] %v320
      $region36: #{masked_cross_entropy_loss.1} parent=27 // pred_fallthru
        _
      %p322 = scmp.lt.s32.totalorder %s26, 1
      %s323 = scalar_select %p322, %s26, 1
      %s324 = scalar_lea.vmem %s3, %s323
      %p325 = scmp.lt.s32.totalorder %s26, 1
      %s326 = scalar_select %p325, %s26, 1
      %s327 = scalar_lea.vmem %s4, %s326
      // Predicated region
      $region37: #{masked_cross_entropy_loss.1} parent=27 // pred_check
        %p328 = pneg %p108
      $region38: #{masked_cross_entropy_loss.1} parent=27 // pred_check_branch
        %330 = sbr.rel (%p328) target = $region40
      $region39: #{masked_cross_entropy_loss.1} parent=27 // pred_region
        _
      $region40: #{masked_cross_entropy_loss.1} parent=27 // pred_fallthru
        _
      // Predicated region
      $region41: #{masked_cross_entropy_loss.1} parent=27 // pred_check
        %p331 = pneg %p134
      $region42: #{masked_cross_entropy_loss.1} parent=27 // pred_check_branch
        %333 = sbr.rel (%p331) target = $region44
      $region43: #{masked_cross_entropy_loss.1} parent=27 // pred_region
        _
      $region44: #{masked_cross_entropy_loss.1} parent=27 // pred_fallthru
        _
    $region28: #{masked_cross_entropy_loss.1} parent=5 // pred_fallthru
      _
    %p334 = scmp.le.s32.totalorder 2, %s17
    // Predicated region
    $region45: #{masked_cross_entropy_loss.1} parent=5 // pred_check
      %p335 = pneg %p334
    $region46: #{masked_cross_entropy_loss.1} parent=5 // pred_check_branch
      %337 = sbr.rel (%p335) target = $region48
    $region47: #{masked_cross_entropy_loss.1} parent=5 // pred_region
      %s338 = ssub.s32 %s17, 2
      // Predicated region
      $region49: #{masked_cross_entropy_loss.1} parent=47 // pred_check
        %p339 = pneg %p114
      $region50: #{masked_cross_entropy_loss.1} parent=47 // pred_check_branch
        %341 = sbr.rel (%p339) target = $region52
      $region51: #{masked_cross_entropy_loss.1} parent=47 // pred_region
        %p342 = scmp.lt.s32.totalorder %s28, 1
        %s343 = scalar_select %p342, %s28, 1
        %s344 = scalar_lea.vmem %s3, %s343
      $region52: #{masked_cross_entropy_loss.1} parent=47 // pred_fallthru
        _
      // Predicated region
      $region53: #{masked_cross_entropy_loss.1} parent=47 // pred_check
        %p345 = pneg %p140
      $region54: #{masked_cross_entropy_loss.1} parent=47 // pred_check_branch
        %347 = sbr.rel (%p345) target = $region56
      $region55: #{masked_cross_entropy_loss.1} parent=47 // pred_region
        %p348 = scmp.lt.s32.totalorder %s28, 1
        %s349 = scalar_select %p348, %s28, 1
        %s350 = scalar_lea.vmem %s4, %s349
      $region56: #{masked_cross_entropy_loss.1} parent=47 // pred_fallthru
        _
    $region48: #{masked_cross_entropy_loss.1} parent=5 // pred_fallthru
      _
  $region6: #{masked_cross_entropy_loss.1} parent=0 // loop_footer
    %s21 = sadd.s32 1, %s17
  $region7: #{masked_cross_entropy_loss.1} parent=0 // loop_footer_branch
    %16 = sbr.rel target = $region3
  $region8: #{masked_cross_entropy_loss.1} parent=0 // loop_exit
    _

</llo_original>
